<compile_context>
chip_gen: v7x
topology: tpu7x:2x2x1
jax: 0.10.0
libtpu: 0.0.40
codegen_flags: <defaults>
</compile_context>

<pallas_src>
import jax
import jax.numpy as jnp
import numpy as np
from jax.experimental import pallas as pl
from jax.experimental.pallas import tpu as pltpu

INPUT_SIZE = 18
HIDDEN = 32
OUTPUT = 10
SEQ = 8

_I_PAD = 128         # input size padded to full lane width (unmasked MXU pass)
# Packed parameter block layout (rows x 128 lanes, f32):
_ROW_WIH = 0         # rows   0:128 -> W_ih^T zero-padded (18 -> 128 rows)
_ROW_WHH = 128       # rows 128:160 -> W_hh^T (32 rows)
_ROW_B = 160         # row   160    -> b_ih + b_hh
_ROW_WLIN = 168      # rows 168:200 -> W_lin^T zero-padded to 128 lanes
_ROW_BLIN = 200      # row   200    -> b_lin zero-padded to 128 lanes
_PACK_ROWS = 208


def _lstm_kernel(x_ref, p_ref, state_ref, out_ref, state_out_ref):
    """x_ref: (SEQ, 128) f32 zero-padded input.
    p_ref: (208, 128) packed params.
    state_ref / state_out_ref: (2, 128) f32; row 0 lanes 0:32 = h, row 1 = c.
    out_ref: (1, 128) f32, lanes 0:10 valid (= predictions[-1])."""
    H = HIDDEN
    S = x_ref.shape[0]

    wih = p_ref[pl.ds(_ROW_WIH, _I_PAD), :]       # (128, 128) padded W_ih^T
    whh = p_ref[pl.ds(_ROW_WHH, H), :]            # (32, 128)  W_hh^T
    b = p_ref[pl.ds(_ROW_B, 1), :]                # (1, 128)   b_ih + b_hh
    wlin = p_ref[pl.ds(_ROW_WLIN, H), :]          # (32, 128)  padded W_lin^T
    blin = p_ref[pl.ds(_ROW_BLIN, 1), :]          # (1, 128)   padded b_lin

    # Hoisted input projection: one unmasked (8,128)@(128,128) matmul + bias.
    xw = jnp.dot(x_ref[...], wih, preferred_element_type=jnp.float32) + b  # (8,128)

    # Lane masks / constants hoisted out of the recurrence.
    lane = jax.lax.broadcasted_iota(jnp.int32, (1, 4 * H), 1)
    g_mask = (lane >= 2 * H) & (lane < 3 * H)         # g gate lanes -> tanh
    pre_scale = jnp.where(g_mask, 1.0, 0.5).astype(jnp.float32)

    # Carried state from the previous forward() call (PyTorch self.hidden_cell).
    h = state_ref[0:1, 0:H]                            # (1, 32)
    c = state_ref[1:2, 0:H]                            # (1, 32)

    # Statically unrolled 8-step recurrence.
    # NOTE(perf): the same (32,128) W_hh^T RHS is used every step; making it
    # weight-stationary via pltpu.matmul_push_rhs/matmul_acc_lhs/matmul_pop
    # (and, on v7x, seeding the MRB accumulator with xw[t]) would shave the
    # per-step RHS staging — left to jnp.dot pending bundle verification.
    for t in range(S):
        gates = xw[t:t + 1, :] + jnp.dot(h, whh, preferred_element_type=jnp.float32)
        # Single EUP pass: sigmoid(x) = 0.5*(1 + tanh(x/2)); g lanes keep tanh(x).
        th = jnp.tanh(gates * pre_scale)
        act = jnp.where(g_mask, th, 0.5 * th + 0.5)
        i = act[:, 0:H]
        f = act[:, H:2 * H]
        g = act[:, 2 * H:3 * H]
        o = act[:, 3 * H:4 * H]
        c = f * c + i * g
        h = o * jnp.tanh(c)

    # predictions[-1] depends only on the final hidden state.
    out_ref[...] = jnp.dot(h, wlin, preferred_element_type=jnp.float32) + blin

    # Write back the carried (h, c) state (aliased in place with state_ref).
    state_out_ref[...] = jnp.zeros_like(state_out_ref)
    state_out_ref[0:1, 0:H] = h
    state_out_ref[1:2, 0:H] = c


def pack_params(params):
    """One-time parameter prep (transpose / bias-combine / pad / pack)."""
    w_ih, w_hh, b_ih, b_hh, w_lin, b_lin = params
    packed = jnp.zeros((_PACK_ROWS, 4 * HIDDEN), jnp.float32)
    packed = packed.at[_ROW_WIH:_ROW_WIH + INPUT_SIZE, :].set(jnp.transpose(w_ih))
    packed = packed.at[_ROW_WHH:_ROW_WHH + HIDDEN, :].set(jnp.transpose(w_hh))
    packed = packed.at[_ROW_B, :].set(b_ih + b_hh)
    packed = packed.at[_ROW_WLIN:_ROW_WLIN + HIDDEN, 0:OUTPUT].set(jnp.transpose(w_lin))
    packed = packed.at[_ROW_BLIN, 0:OUTPUT].set(b_lin)
    return packed


def pad_input(x):
    """Zero-pad (seq, 18) -> (seq, 128) so the input projection is lane-dense."""
    return jnp.pad(x, ((0, 0), (0, _I_PAD - INPUT_SIZE)))


@jax.jit
def my_lstm_forward(x_padded, packed_params, state):
    """x_padded: (SEQ, 128) f32.  packed_params: (208, 128) f32.
    state: (2, 128) f32 carried (h, c).  Returns (predictions[-1] (10,), new_state)."""
    pred, new_state = pl.pallas_call(
        _lstm_kernel,
        out_shape=(
            jax.ShapeDtypeStruct((1, 4 * HIDDEN), jnp.float32),   # predictions[-1]
            jax.ShapeDtypeStruct((2, 4 * HIDDEN), jnp.float32),   # new (h, c)
        ),
        in_specs=[
            pl.BlockSpec(memory_space=pltpu.MemorySpace.VMEM),    # x (padded)
            pl.BlockSpec(memory_space=pltpu.MemorySpace.VMEM),    # packed params
            pl.BlockSpec(memory_space=pltpu.MemorySpace.VMEM),    # carried state
        ],
        out_specs=(
            pl.BlockSpec(memory_space=pltpu.MemorySpace.VMEM),
            pl.BlockSpec(memory_space=pltpu.MemorySpace.VMEM),
        ),
        input_output_aliases={2: 1},   # state buffer updated in place
    )(x_padded, packed_params, state)
    return pred[0, :OUTPUT], new_state


def _reference_forward(x, params, h0, c0):
    """NumPy float32 reference mirroring PyTorch nn.LSTM + Linear (batch=1),
    including the persistent hidden_cell.  Returns (predictions[-1], h, c)."""
    w_ih, w_hh, b_ih, b_hh, w_lin, b_lin = [np.asarray(p, np.float32) for p in params]
    x = np.asarray(x, np.float32)
    h = np.asarray(h0, np.float32).copy()
    c = np.asarray(c0, np.float32).copy()
    H = HIDDEN

    def sig(v):
        return 1.0 / (1.0 + np.exp(-v))

    hs = []
    for t in range(x.shape[0]):
        gates = x[t] @ w_ih.T + b_ih + h @ w_hh.T + b_hh
        i = sig(gates[0:H])
        f = sig(gates[H:2 * H])
        g = np.tanh(gates[2 * H:3 * H])
        o = sig(gates[3 * H:4 * H])
        c = f * c + i * g
        h = o * np.tanh(c)
        hs.append(h.copy())
    preds = np.stack(hs) @ w_lin.T + b_lin
    return preds[-1], h, c


def init_params(key):
    # Same distribution PyTorch uses: U(-1/sqrt(H), 1/sqrt(H)).
    k = 1.0 / np.sqrt(HIDDEN)
    keys = jax.random.split(key, 6)
    w_ih = jax.random.uniform(keys[0], (4 * HIDDEN, INPUT_SIZE), jnp.float32, -k, k)
    w_hh = jax.random.uniform(keys[1], (4 * HIDDEN, HIDDEN), jnp.float32, -k, k)
    b_ih = jax.random.uniform(keys[2], (4 * HIDDEN,), jnp.float32, -k, k)
    b_hh = jax.random.uniform(keys[3], (4 * HIDDEN,), jnp.float32, -k, k)
    w_lin = jax.random.uniform(keys[4], (OUTPUT, HIDDEN), jnp.float32, -k, k)
    b_lin = jax.random.uniform(keys[5], (OUTPUT,), jnp.float32, -k, k)
    return (w_ih, w_hh, b_ih, b_hh, w_lin, b_lin)


if __name__ == "__main__":
    key = jax.random.PRNGKey(0)
    pkey, x1key, x2key = jax.random.split(key, 3)
    params = init_params(pkey)
    x1 = jax.random.normal(x1key, (SEQ, INPUT_SIZE), jnp.float32)
    x2 = jax.random.normal(x2key, (SEQ, INPUT_SIZE), jnp.float32)

    # One-time prep (hoisted out of the per-call path).
    packed = jax.block_until_ready(pack_params(params))
    state = jnp.zeros((2, 4 * HIDDEN), jnp.float32)   # hidden_cell starts at zeros

    # Two successive stateful forward() calls (hidden_cell carried in place).
    pred1, state = my_lstm_forward(pad_input(x1), packed, state)
    pred2, state = my_lstm_forward(pad_input(x2), packed, state)
    pred2 = jax.block_until_ready(pred2)

    # NumPy reference replaying the same two stateful calls.
    h0 = np.zeros((HIDDEN,), np.float32)
    c0 = np.zeros((HIDDEN,), np.float32)
    ref1, h1, c1 = _reference_forward(np.asarray(x1), params, h0, c0)
    ref2, h2, c2 = _reference_forward(np.asarray(x2), params, h1, c1)

    assert pred1.shape == (OUTPUT,) and pred2.shape == (OUTPUT,)
    ok = (
        np.allclose(np.asarray(pred1), ref1, atol=1e-4, rtol=1e-4)
        and np.allclose(np.asarray(pred2), ref2, atol=1e-4, rtol=1e-4)
        and np.allclose(np.asarray(state[0, :HIDDEN]), h2, atol=1e-4, rtol=1e-4)
        and np.allclose(np.asarray(state[1, :HIDDEN]), c2, atol=1e-4, rtol=1e-4)
    )
    assert ok, "Pallas output mismatch vs reference"
    print("KERNEL_OK")
</pallas_src>

<mosaic_0001>
module attributes {stable_mosaic.version = 11 : i64} {
  func.func @_lstm_kernel(%arg0: memref<8x128xf32, #tpu.memory_space<vmem>>, %arg1: memref<208x128xf32, #tpu.memory_space<vmem>>, %arg2: memref<2x128xf32, #tpu.memory_space<vmem>>, %arg3: memref<1x128xf32, #tpu.memory_space<vmem>>, %arg4: memref<2x128xf32, #tpu.memory_space<vmem>>) attributes {dimension_semantics = [], scalar_prefetch = 0 : i64, scratch_operands = 0 : i64, tpu.core_type = #tpu.core_type<tc>} {
    %c0 = arith.constant 0 : index
    %c0_0 = arith.constant 0 : index
    %0 = vector.load %arg1[%c0, %c0_0] : memref<208x128xf32, #tpu.memory_space<vmem>>, vector<128x128xf32>
    %c128 = arith.constant 128 : index
    %c0_1 = arith.constant 0 : index
    %1 = vector.load %arg1[%c128, %c0_1] : memref<208x128xf32, #tpu.memory_space<vmem>>, vector<32x128xf32>
    %c160 = arith.constant 160 : index
    %c0_2 = arith.constant 0 : index
    %2 = vector.load %arg1[%c160, %c0_2] : memref<208x128xf32, #tpu.memory_space<vmem>>, vector<1x128xf32>
    %c168 = arith.constant 168 : index
    %c0_3 = arith.constant 0 : index
    %3 = vector.load %arg1[%c168, %c0_3] : memref<208x128xf32, #tpu.memory_space<vmem>>, vector<32x128xf32>
    %c200 = arith.constant 200 : index
    %c0_4 = arith.constant 0 : index
    %4 = vector.load %arg1[%c200, %c0_4] : memref<208x128xf32, #tpu.memory_space<vmem>>, vector<1x128xf32>
    %c0_5 = arith.constant 0 : index
    %c0_6 = arith.constant 0 : index
    %5 = vector.load %arg0[%c0_5, %c0_6] : memref<8x128xf32, #tpu.memory_space<vmem>>, vector<8x128xf32>
    %cst = arith.constant dense<0.000000e+00> : vector<8x128xf32>
    %6 = tpu.matmul %5, %0, %cst {dimension_numbers = #tpu.dot_dimension_numbers<[1], [0], [0], [1], [0, 0, 1, 1], [], []>} : vector<8x128xf32>, vector<128x128xf32>, vector<8x128xf32> -> vector<8x128xf32>
    %7 = vector.broadcast %2 : vector<1x128xf32> to vector<8x128xf32>
    %8 = arith.addf %6, %7 : vector<8x128xf32>
    %9 = tpu.iota {dimensions = array<i32: 1>} : vector<1x128xi32>
    %c64_i32 = arith.constant 64 : i32
    %10 = vector.broadcast %c64_i32 : i32 to vector<1x128xi32>
    %11 = arith.cmpi sge, %9, %10 : vector<1x128xi32>
    %c96_i32 = arith.constant 96 : i32
    %12 = vector.broadcast %c96_i32 : i32 to vector<1x128xi32>
    %13 = arith.cmpi slt, %9, %12 : vector<1x128xi32>
    %14 = arith.andi %11, %13 : vector<1x128xi1>
    %cst_7 = arith.constant 1.000000e+00 : f32
    %cst_8 = arith.constant 5.000000e-01 : f32
    %15 = vector.broadcast %cst_7 : f32 to vector<1x128xf32>
    %16 = vector.broadcast %cst_8 : f32 to vector<1x128xf32>
    %17 = arith.select %14, %15, %16 : vector<1x128xi1>, vector<1x128xf32>
    %c0_9 = arith.constant 0 : index
    %c0_10 = arith.constant 0 : index
    %18 = vector.load %arg2[%c0_9, %c0_10] : memref<2x128xf32, #tpu.memory_space<vmem>>, vector<1x32xf32>
    %c1 = arith.constant 1 : index
    %c0_11 = arith.constant 0 : index
    %19 = vector.load %arg2[%c1, %c0_11] : memref<2x128xf32, #tpu.memory_space<vmem>>, vector<1x32xf32>
    %20 = vector.extract_strided_slice %8 {offsets = [0, 0], sizes = [1, 128], strides = [1, 1]} : vector<8x128xf32> to vector<1x128xf32>
    %cst_12 = arith.constant dense<0.000000e+00> : vector<1x128xf32>
    %21 = tpu.matmul %18, %1, %cst_12 {dimension_numbers = #tpu.dot_dimension_numbers<[1], [0], [0], [1], [0, 0, 1, 1], [], []>} : vector<1x32xf32>, vector<32x128xf32>, vector<1x128xf32> -> vector<1x128xf32>
    %22 = arith.addf %20, %21 : vector<1x128xf32>
    %23 = arith.mulf %22, %17 : vector<1x128xf32>
    %24 = math.tanh %23 : vector<1x128xf32>
    %cst_13 = arith.constant 5.000000e-01 : f32
    %25 = vector.broadcast %cst_13 : f32 to vector<1x128xf32>
    %26 = arith.mulf %25, %24 : vector<1x128xf32>
    %cst_14 = arith.constant 5.000000e-01 : f32
    %27 = vector.broadcast %cst_14 : f32 to vector<1x128xf32>
    %28 = arith.addf %26, %27 : vector<1x128xf32>
    %29 = arith.select %14, %24, %28 : vector<1x128xi1>, vector<1x128xf32>
    %30 = vector.extract_strided_slice %29 {offsets = [0, 0], sizes = [1, 32], strides = [1, 1]} : vector<1x128xf32> to vector<1x32xf32>
    %31 = vector.extract_strided_slice %29 {offsets = [0, 32], sizes = [1, 32], strides = [1, 1]} : vector<1x128xf32> to vector<1x32xf32>
    %32 = vector.extract_strided_slice %29 {offsets = [0, 64], sizes = [1, 32], strides = [1, 1]} : vector<1x128xf32> to vector<1x32xf32>
    %33 = vector.extract_strided_slice %29 {offsets = [0, 96], sizes = [1, 32], strides = [1, 1]} : vector<1x128xf32> to vector<1x32xf32>
    %34 = arith.mulf %31, %19 : vector<1x32xf32>
    %35 = arith.mulf %30, %32 : vector<1x32xf32>
    %36 = arith.addf %34, %35 : vector<1x32xf32>
    %37 = math.tanh %36 : vector<1x32xf32>
    %38 = arith.mulf %33, %37 : vector<1x32xf32>
    %39 = vector.extract_strided_slice %8 {offsets = [1, 0], sizes = [1, 128], strides = [1, 1]} : vector<8x128xf32> to vector<1x128xf32>
    %cst_15 = arith.constant dense<0.000000e+00> : vector<1x128xf32>
    %40 = tpu.matmul %38, %1, %cst_15 {dimension_numbers = #tpu.dot_dimension_numbers<[1], [0], [0], [1], [0, 0, 1, 1], [], []>} : vector<1x32xf32>, vector<32x128xf32>, vector<1x128xf32> -> vector<1x128xf32>
    %41 = arith.addf %39, %40 : vector<1x128xf32>
    %42 = arith.mulf %41, %17 : vector<1x128xf32>
    %43 = math.tanh %42 : vector<1x128xf32>
    %cst_16 = arith.constant 5.000000e-01 : f32
    %44 = vector.broadcast %cst_16 : f32 to vector<1x128xf32>
    %45 = arith.mulf %44, %43 : vector<1x128xf32>
    %cst_17 = arith.constant 5.000000e-01 : f32
    %46 = vector.broadcast %cst_17 : f32 to vector<1x128xf32>
    %47 = arith.addf %45, %46 : vector<1x128xf32>
    %48 = arith.select %14, %43, %47 : vector<1x128xi1>, vector<1x128xf32>
    %49 = vector.extract_strided_slice %48 {offsets = [0, 0], sizes = [1, 32], strides = [1, 1]} : vector<1x128xf32> to vector<1x32xf32>
    %50 = vector.extract_strided_slice %48 {offsets = [0, 32], sizes = [1, 32], strides = [1, 1]} : vector<1x128xf32> to vector<1x32xf32>
    %51 = vector.extract_strided_slice %48 {offsets = [0, 64], sizes = [1, 32], strides = [1, 1]} : vector<1x128xf32> to vector<1x32xf32>
    %52 = vector.extract_strided_slice %48 {offsets = [0, 96], sizes = [1, 32], strides = [1, 1]} : vector<1x128xf32> to vector<1x32xf32>
    %53 = arith.mulf %50, %36 : vector<1x32xf32>
    %54 = arith.mulf %49, %51 : vector<1x32xf32>
    %55 = arith.addf %53, %54 : vector<1x32xf32>
    %56 = math.tanh %55 : vector<1x32xf32>
    %57 = arith.mulf %52, %56 : vector<1x32xf32>
    %58 = vector.extract_strided_slice %8 {offsets = [2, 0], sizes = [1, 128], strides = [1, 1]} : vector<8x128xf32> to vector<1x128xf32>
    %cst_18 = arith.constant dense<0.000000e+00> : vector<1x128xf32>
    %59 = tpu.matmul %57, %1, %cst_18 {dimension_numbers = #tpu.dot_dimension_numbers<[1], [0], [0], [1], [0, 0, 1, 1], [], []>} : vector<1x32xf32>, vector<32x128xf32>, vector<1x128xf32> -> vector<1x128xf32>
    %60 = arith.addf %58, %59 : vector<1x128xf32>
    %61 = arith.mulf %60, %17 : vector<1x128xf32>
    %62 = math.tanh %61 : vector<1x128xf32>
    %cst_19 = arith.constant 5.000000e-01 : f32
    %63 = vector.broadcast %cst_19 : f32 to vector<1x128xf32>
    %64 = arith.mulf %63, %62 : vector<1x128xf32>
    %cst_20 = arith.constant 5.000000e-01 : f32
    %65 = vector.broadcast %cst_20 : f32 to vector<1x128xf32>
    %66 = arith.addf %64, %65 : vector<1x128xf32>
    %67 = arith.select %14, %62, %66 : vector<1x128xi1>, vector<1x128xf32>
    %68 = vector.extract_strided_slice %67 {offsets = [0, 0], sizes = [1, 32], strides = [1, 1]} : vector<1x128xf32> to vector<1x32xf32>
    %69 = vector.extract_strided_slice %67 {offsets = [0, 32], sizes = [1, 32], strides = [1, 1]} : vector<1x128xf32> to vector<1x32xf32>
    %70 = vector.extract_strided_slice %67 {offsets = [0, 64], sizes = [1, 32], strides = [1, 1]} : vector<1x128xf32> to vector<1x32xf32>
    %71 = vector.extract_strided_slice %67 {offsets = [0, 96], sizes = [1, 32], strides = [1, 1]} : vector<1x128xf32> to vector<1x32xf32>
    %72 = arith.mulf %69, %55 : vector<1x32xf32>
    %73 = arith.mulf %68, %70 : vector<1x32xf32>
    %74 = arith.addf %72, %73 : vector<1x32xf32>
    %75 = math.tanh %74 : vector<1x32xf32>
    %76 = arith.mulf %71, %75 : vector<1x32xf32>
    %77 = vector.extract_strided_slice %8 {offsets = [3, 0], sizes = [1, 128], strides = [1, 1]} : vector<8x128xf32> to vector<1x128xf32>
    %cst_21 = arith.constant dense<0.000000e+00> : vector<1x128xf32>
    %78 = tpu.matmul %76, %1, %cst_21 {dimension_numbers = #tpu.dot_dimension_numbers<[1], [0], [0], [1], [0, 0, 1, 1], [], []>} : vector<1x32xf32>, vector<32x128xf32>, vector<1x128xf32> -> vector<1x128xf32>
    %79 = arith.addf %77, %78 : vector<1x128xf32>
    %80 = arith.mulf %79, %17 : vector<1x128xf32>
    %81 = math.tanh %80 : vector<1x128xf32>
    %cst_22 = arith.constant 5.000000e-01 : f32
    %82 = vector.broadcast %cst_22 : f32 to vector<1x128xf32>
    %83 = arith.mulf %82, %81 : vector<1x128xf32>
    %cst_23 = arith.constant 5.000000e-01 : f32
    %84 = vector.broadcast %cst_23 : f32 to vector<1x128xf32>
    %85 = arith.addf %83, %84 : vector<1x128xf32>
    %86 = arith.select %14, %81, %85 : vector<1x128xi1>, vector<1x128xf32>
    %87 = vector.extract_strided_slice %86 {offsets = [0, 0], sizes = [1, 32], strides = [1, 1]} : vector<1x128xf32> to vector<1x32xf32>
    %88 = vector.extract_strided_slice %86 {offsets = [0, 32], sizes = [1, 32], strides = [1, 1]} : vector<1x128xf32> to vector<1x32xf32>
    %89 = vector.extract_strided_slice %86 {offsets = [0, 64], sizes = [1, 32], strides = [1, 1]} : vector<1x128xf32> to vector<1x32xf32>
    %90 = vector.extract_strided_slice %86 {offsets = [0, 96], sizes = [1, 32], strides = [1, 1]} : vector<1x128xf32> to vector<1x32xf32>
    %91 = arith.mulf %88, %74 : vector<1x32xf32>
    %92 = arith.mulf %87, %89 : vector<1x32xf32>
    %93 = arith.addf %91, %92 : vector<1x32xf32>
    %94 = math.tanh %93 : vector<1x32xf32>
    %95 = arith.mulf %90, %94 : vector<1x32xf32>
    %96 = vector.extract_strided_slice %8 {offsets = [4, 0], sizes = [1, 128], strides = [1, 1]} : vector<8x128xf32> to vector<1x128xf32>
    %cst_24 = arith.constant dense<0.000000e+00> : vector<1x128xf32>
    %97 = tpu.matmul %95, %1, %cst_24 {dimension_numbers = #tpu.dot_dimension_numbers<[1], [0], [0], [1], [0, 0, 1, 1], [], []>} : vector<1x32xf32>, vector<32x128xf32>, vector<1x128xf32> -> vector<1x128xf32>
    %98 = arith.addf %96, %97 : vector<1x128xf32>
    %99 = arith.mulf %98, %17 : vector<1x128xf32>
    %100 = math.tanh %99 : vector<1x128xf32>
    %cst_25 = arith.constant 5.000000e-01 : f32
    %101 = vector.broadcast %cst_25 : f32 to vector<1x128xf32>
    %102 = arith.mulf %101, %100 : vector<1x128xf32>
    %cst_26 = arith.constant 5.000000e-01 : f32
    %103 = vector.broadcast %cst_26 : f32 to vector<1x128xf32>
    %104 = arith.addf %102, %103 : vector<1x128xf32>
    %105 = arith.select %14, %100, %104 : vector<1x128xi1>, vector<1x128xf32>
    %106 = vector.extract_strided_slice %105 {offsets = [0, 0], sizes = [1, 32], strides = [1, 1]} : vector<1x128xf32> to vector<1x32xf32>
    %107 = vector.extract_strided_slice %105 {offsets = [0, 32], sizes = [1, 32], strides = [1, 1]} : vector<1x128xf32> to vector<1x32xf32>
    %108 = vector.extract_strided_slice %105 {offsets = [0, 64], sizes = [1, 32], strides = [1, 1]} : vector<1x128xf32> to vector<1x32xf32>
    %109 = vector.extract_strided_slice %105 {offsets = [0, 96], sizes = [1, 32], strides = [1, 1]} : vector<1x128xf32> to vector<1x32xf32>
    %110 = arith.mulf %107, %93 : vector<1x32xf32>
    %111 = arith.mulf %106, %108 : vector<1x32xf32>
    %112 = arith.addf %110, %111 : vector<1x32xf32>
    %113 = math.tanh %112 : vector<1x32xf32>
    %114 = arith.mulf %109, %113 : vector<1x32xf32>
    %115 = vector.extract_strided_slice %8 {offsets = [5, 0], sizes = [1, 128], strides = [1, 1]} : vector<8x128xf32> to vector<1x128xf32>
    %cst_27 = arith.constant dense<0.000000e+00> : vector<1x128xf32>
    %116 = tpu.matmul %114, %1, %cst_27 {dimension_numbers = #tpu.dot_dimension_numbers<[1], [0], [0], [1], [0, 0, 1, 1], [], []>} : vector<1x32xf32>, vector<32x128xf32>, vector<1x128xf32> -> vector<1x128xf32>
    %117 = arith.addf %115, %116 : vector<1x128xf32>
    %118 = arith.mulf %117, %17 : vector<1x128xf32>
    %119 = math.tanh %118 : vector<1x128xf32>
    %cst_28 = arith.constant 5.000000e-01 : f32
    %120 = vector.broadcast %cst_28 : f32 to vector<1x128xf32>
    %121 = arith.mulf %120, %119 : vector<1x128xf32>
    %cst_29 = arith.constant 5.000000e-01 : f32
    %122 = vector.broadcast %cst_29 : f32 to vector<1x128xf32>
    %123 = arith.addf %121, %122 : vector<1x128xf32>
    %124 = arith.select %14, %119, %123 : vector<1x128xi1>, vector<1x128xf32>
    %125 = vector.extract_strided_slice %124 {offsets = [0, 0], sizes = [1, 32], strides = [1, 1]} : vector<1x128xf32> to vector<1x32xf32>
    %126 = vector.extract_strided_slice %124 {offsets = [0, 32], sizes = [1, 32], strides = [1, 1]} : vector<1x128xf32> to vector<1x32xf32>
    %127 = vector.extract_strided_slice %124 {offsets = [0, 64], sizes = [1, 32], strides = [1, 1]} : vector<1x128xf32> to vector<1x32xf32>
    %128 = vector.extract_strided_slice %124 {offsets = [0, 96], sizes = [1, 32], strides = [1, 1]} : vector<1x128xf32> to vector<1x32xf32>
    %129 = arith.mulf %126, %112 : vector<1x32xf32>
    %130 = arith.mulf %125, %127 : vector<1x32xf32>
    %131 = arith.addf %129, %130 : vector<1x32xf32>
    %132 = math.tanh %131 : vector<1x32xf32>
    %133 = arith.mulf %128, %132 : vector<1x32xf32>
    %134 = vector.extract_strided_slice %8 {offsets = [6, 0], sizes = [1, 128], strides = [1, 1]} : vector<8x128xf32> to vector<1x128xf32>
    %cst_30 = arith.constant dense<0.000000e+00> : vector<1x128xf32>
    %135 = tpu.matmul %133, %1, %cst_30 {dimension_numbers = #tpu.dot_dimension_numbers<[1], [0], [0], [1], [0, 0, 1, 1], [], []>} : vector<1x32xf32>, vector<32x128xf32>, vector<1x128xf32> -> vector<1x128xf32>
    %136 = arith.addf %134, %135 : vector<1x128xf32>
    %137 = arith.mulf %136, %17 : vector<1x128xf32>
    %138 = math.tanh %137 : vector<1x128xf32>
    %cst_31 = arith.constant 5.000000e-01 : f32
    %139 = vector.broadcast %cst_31 : f32 to vector<1x128xf32>
    %140 = arith.mulf %139, %138 : vector<1x128xf32>
    %cst_32 = arith.constant 5.000000e-01 : f32
    %141 = vector.broadcast %cst_32 : f32 to vector<1x128xf32>
    %142 = arith.addf %140, %141 : vector<1x128xf32>
    %143 = arith.select %14, %138, %142 : vector<1x128xi1>, vector<1x128xf32>
    %144 = vector.extract_strided_slice %143 {offsets = [0, 0], sizes = [1, 32], strides = [1, 1]} : vector<1x128xf32> to vector<1x32xf32>
    %145 = vector.extract_strided_slice %143 {offsets = [0, 32], sizes = [1, 32], strides = [1, 1]} : vector<1x128xf32> to vector<1x32xf32>
    %146 = vector.extract_strided_slice %143 {offsets = [0, 64], sizes = [1, 32], strides = [1, 1]} : vector<1x128xf32> to vector<1x32xf32>
    %147 = vector.extract_strided_slice %143 {offsets = [0, 96], sizes = [1, 32], strides = [1, 1]} : vector<1x128xf32> to vector<1x32xf32>
    %148 = arith.mulf %145, %131 : vector<1x32xf32>
    %149 = arith.mulf %144, %146 : vector<1x32xf32>
    %150 = arith.addf %148, %149 : vector<1x32xf32>
    %151 = math.tanh %150 : vector<1x32xf32>
    %152 = arith.mulf %147, %151 : vector<1x32xf32>
    %153 = vector.extract_strided_slice %8 {offsets = [7, 0], sizes = [1, 128], strides = [1, 1]} : vector<8x128xf32> to vector<1x128xf32>
    %cst_33 = arith.constant dense<0.000000e+00> : vector<1x128xf32>
    %154 = tpu.matmul %152, %1, %cst_33 {dimension_numbers = #tpu.dot_dimension_numbers<[1], [0], [0], [1], [0, 0, 1, 1], [], []>} : vector<1x32xf32>, vector<32x128xf32>, vector<1x128xf32> -> vector<1x128xf32>
    %155 = arith.addf %153, %154 : vector<1x128xf32>
    %156 = arith.mulf %155, %17 : vector<1x128xf32>
    %157 = math.tanh %156 : vector<1x128xf32>
    %cst_34 = arith.constant 5.000000e-01 : f32
    %158 = vector.broadcast %cst_34 : f32 to vector<1x128xf32>
    %159 = arith.mulf %158, %157 : vector<1x128xf32>
    %cst_35 = arith.constant 5.000000e-01 : f32
    %160 = vector.broadcast %cst_35 : f32 to vector<1x128xf32>
    %161 = arith.addf %159, %160 : vector<1x128xf32>
    %162 = arith.select %14, %157, %161 : vector<1x128xi1>, vector<1x128xf32>
    %163 = vector.extract_strided_slice %162 {offsets = [0, 0], sizes = [1, 32], strides = [1, 1]} : vector<1x128xf32> to vector<1x32xf32>
    %164 = vector.extract_strided_slice %162 {offsets = [0, 32], sizes = [1, 32], strides = [1, 1]} : vector<1x128xf32> to vector<1x32xf32>
    %165 = vector.extract_strided_slice %162 {offsets = [0, 64], sizes = [1, 32], strides = [1, 1]} : vector<1x128xf32> to vector<1x32xf32>
    %166 = vector.extract_strided_slice %162 {offsets = [0, 96], sizes = [1, 32], strides = [1, 1]} : vector<1x128xf32> to vector<1x32xf32>
    %167 = arith.mulf %164, %150 : vector<1x32xf32>
    %168 = arith.mulf %163, %165 : vector<1x32xf32>
    %169 = arith.addf %167, %168 : vector<1x32xf32>
    %170 = math.tanh %169 : vector<1x32xf32>
    %171 = arith.mulf %166, %170 : vector<1x32xf32>
    %cst_36 = arith.constant dense<0.000000e+00> : vector<1x128xf32>
    %172 = tpu.matmul %171, %3, %cst_36 {dimension_numbers = #tpu.dot_dimension_numbers<[1], [0], [0], [1], [0, 0, 1, 1], [], []>} : vector<1x32xf32>, vector<32x128xf32>, vector<1x128xf32> -> vector<1x128xf32>
    %173 = arith.addf %172, %4 : vector<1x128xf32>
    %c0_37 = arith.constant 0 : index
    %c0_38 = arith.constant 0 : index
    %174 = vector.load %arg3[%c0_37, %c0_38] : memref<1x128xf32, #tpu.memory_space<vmem>>, vector<1x128xf32>
    tpu.vector_store %arg3[%c0_37, %c0_38], %173 {strides = array<i32>} : memref<1x128xf32, #tpu.memory_space<vmem>>, vector<1x128xf32>,
    %cst_39 = arith.constant 0.000000e+00 : f32
    %175 = vector.broadcast %cst_39 : f32 to vector<2x128xf32>
    %c0_40 = arith.constant 0 : index
    %c0_41 = arith.constant 0 : index
    %176 = vector.load %arg4[%c0_40, %c0_41] : memref<2x128xf32, #tpu.memory_space<vmem>>, vector<2x128xf32>
    tpu.vector_store %arg4[%c0_40, %c0_41], %175 {strides = array<i32>} : memref<2x128xf32, #tpu.memory_space<vmem>>, vector<2x128xf32>,
    %c0_42 = arith.constant 0 : index
    %c0_43 = arith.constant 0 : index
    %177 = vector.load %arg4[%c0_42, %c0_43] : memref<2x128xf32, #tpu.memory_space<vmem>>, vector<1x32xf32>
    tpu.vector_store %arg4[%c0_42, %c0_43], %171 {strides = array<i32>} : memref<2x128xf32, #tpu.memory_space<vmem>>, vector<1x32xf32>,
    %c1_44 = arith.constant 1 : index
    %c0_45 = arith.constant 0 : index
    %178 = vector.load %arg4[%c1_44, %c0_45] : memref<2x128xf32, #tpu.memory_space<vmem>>, vector<1x32xf32>
    tpu.vector_store %arg4[%c1_44, %c0_45], %169 {strides = array<i32>} : memref<2x128xf32, #tpu.memory_space<vmem>>, vector<1x32xf32>,
    return
  }
}

</mosaic_0001>

<llo_original>
// kernel: my_lstm_forward.1
$region0: #{my_lstm_forward.1}
  #allocation0 [shape = 'u32[]', space=smem, size = 0x4, offset = 0x4, fixed_abs, tag = 'smem constant byte address 0x4 - core index']
  #allocation1 [shape = 'u32[144,128]{1,0:T(1,128)}', space=vmem, size = 0x12000, scoped, tag = 'internal scratch']
  %s0 = inlined_call_operand.vmem [shape: f32[8,128], index: 0, kind: input, shape index: {}]
  %s1 = inlined_call_operand.hbm [shape: f32[208,128], index: 1, kind: input, shape index: {}]
  %s2 = inlined_call_operand.vmem [shape: f32[2,128], index: 2, kind: input, shape index: {}, may-alias: {2,4}]
  %s3 = inlined_call_operand.vmem [shape: f32[1,128], index: 3, kind: output, shape index: {0}]
  %s4 = inlined_call_operand.vmem [shape: f32[2,128], index: 4, kind: output, shape index: {1}, may-alias: {2,4}]
  %5 = xla_tuple %s3, %s4
  %s6 = sld [smem:[#allocation0]]
  $region34: #{my_lstm_forward.1} parent=0
    _
  %s8 = ssub.s32 1, %s6
  %s9 = scalar_select 0, %s8, %s6
  $region1: #{my_lstm_forward.1} parent=0
    #allocation2 [shape = 'u8[106496]{0}', space=vmem, size = 0x1a000, scoped, tag = 'input window, operand 1, single buffered']
    #allocation3 [shape = 's32[1]{0}', space=sflag, size = 0x4, scoped, tag = 'scoped memory for my_lstm_forward.1']
    %10 = vsyncpa [#allocation3], 0
    // Predicated region
    $region2: #{my_lstm_forward.1} parent=1 // pred_check
      _
    $region3: #{my_lstm_forward.1} parent=1 // pred_check_branch
      %12 = sbr.rel (0) target = $region5
    $region4: #{my_lstm_forward.1} parent=1 // pred_region
      _
    $region5: #{my_lstm_forward.1} parent=1 // pred_fallthru
      _
    // Predicated region
    $region6: #{my_lstm_forward.1} parent=1 // pred_check
      _
    $region7: #{my_lstm_forward.1} parent=1 // pred_check_branch
      %14 = sbr.rel (0) target = $region9
    $region8: #{my_lstm_forward.1} parent=1 // pred_region
      %s16 = ssub.s32 3328, 3328
      %17 = vsyncadd [#allocation3], %s16
      %s18 = sshll.u32 [#allocation2], 4
      %s19 = int_to_ptr.vmem [resolvable:$true] %s18
      %24 = dma.hbm_to_vmem [thread:$0]  %s1, 3328, %s19, [#allocation3], 128, 128, 8
    $region9: #{my_lstm_forward.1} parent=1 // pred_fallthru
      _
    // Predicated region
    $region10: #{my_lstm_forward.1} parent=1 // pred_check
      _
    $region11: #{my_lstm_forward.1} parent=1 // pred_check_branch
      %26 = sbr.rel (0) target = $region13
    $region12: #{my_lstm_forward.1} parent=1 // pred_region
      _
    $region13: #{my_lstm_forward.1} parent=1 // pred_fallthru
      _
    // Predicated region
    $region14: #{my_lstm_forward.1} parent=1 // pred_check
      _
    $region15: #{my_lstm_forward.1} parent=1 // pred_check_branch
      %28 = sbr.rel (0) target = $region17
    $region16: #{my_lstm_forward.1} parent=1 // pred_region
      %29 = dma.done [#allocation3], 3328
    $region17: #{my_lstm_forward.1} parent=1 // pred_fallthru
      _
    %v30 = vld [vmem:[#allocation2] sm:$0xff]
    %v31 = vld [vmem:[#allocation2 + $0x8] sm:$0xff]
    %v32 = vld [vmem:[#allocation2 + $0x10] sm:$0xff]
    %v33 = vld [vmem:[#allocation2 + $0x18] sm:$0xff]
    %v34 = vld [vmem:[#allocation2 + $0x20] sm:$0xff]
    %v35 = vld [vmem:[#allocation2 + $0x28] sm:$0xff]
    %v36 = vld [vmem:[#allocation2 + $0x30] sm:$0xff]
    %v37 = vld [vmem:[#allocation2 + $0x38] sm:$0xff]
    %v38 = vld [vmem:[#allocation2 + $0x40] sm:$0xff]
    %v39 = vld [vmem:[#allocation2 + $0x48] sm:$0xff]
    %v40 = vld [vmem:[#allocation2 + $0x50] sm:$0xff]
    %v41 = vld [vmem:[#allocation2 + $0x58] sm:$0xff]
    %v42 = vld [vmem:[#allocation2 + $0x60] sm:$0xff]
    %v43 = vld [vmem:[#allocation2 + $0x68] sm:$0xff]
    %v44 = vld [vmem:[#allocation2 + $0x70] sm:$0xff]
    %v45 = vld [vmem:[#allocation2 + $0x78] sm:$0xff]
    %v46 = vld [vmem:[#allocation2 + $0x80] sm:$0xff]
    %v47 = vld [vmem:[#allocation2 + $0x88] sm:$0xff]
    %v48 = vld [vmem:[#allocation2 + $0x90] sm:$0xff]
    %v49 = vld [vmem:[#allocation2 + $0x98] sm:$0xff]
    %v50 = vld [vmem:[#allocation2 + $0xa0] sm:$0x1]
    %v51 = vld [vmem:[#allocation2 + $0xa8] sm:$0xff]
    %v52 = vld [vmem:[#allocation2 + $0xb0] sm:$0xff]
    %v53 = vld [vmem:[#allocation2 + $0xb8] sm:$0xff]
    %v54 = vld [vmem:[#allocation2 + $0xc0] sm:$0xff]
    %v55 = vld [vmem:[#allocation2 + $0xc8] sm:$0x1]
    %v56 = vld [vmem:[%s0] sm:$0xff]
    %v57 = vlaneseq
    %v58 = vshrl.u32 %v57, 7
    %v59 = vsub.s32 0, %v58
    %v60 = vrot.slane %v50, %v59
    %61 = vmatprep.subr.mxu0 0.0
    %62 = vmatpush1.msra.mxu0 %v30
    %63 = vmatprep.subr.mxu0 0.0
    %64 = vmatpush1.msra.mxu0 %v31
    %65 = vmatprep.subr.mxu0 0.0
    %66 = vmatpush1.msra.mxu0 %v32
    %67 = vmatprep.subr.mxu0 0.0
    %68 = vmatpush1.msra.mxu0 %v33
    %69 = vmatprep.subr.mxu0 0.0
    %70 = vmatpush1.msra.mxu0 %v34
    %71 = vmatprep.subr.mxu0 0.0
    %72 = vmatpush1.msra.mxu0 %v35
    %73 = vmatprep.subr.mxu0 0.0
    %74 = vmatpush1.msra.mxu0 %v36
    %75 = vmatprep.subr.mxu0 0.0
    %76 = vmatpush1.msra.mxu0 %v37
    %77 = vmatprep.subr.mxu0 0.0
    %78 = vmatpush1.msra.mxu0 %v38
    %79 = vmatprep.subr.mxu0 0.0
    %80 = vmatpush1.msra.mxu0 %v39
    %81 = vmatprep.subr.mxu0 0.0
    %82 = vmatpush1.msra.mxu0 %v40
    %83 = vmatprep.subr.mxu0 0.0
    %84 = vmatpush1.msra.mxu0 %v41
    %85 = vmatprep.subr.mxu0 0.0
    %86 = vmatpush1.msra.mxu0 %v42
    %87 = vmatprep.subr.mxu0 0.0
    %88 = vmatpush1.msra.mxu0 %v43
    %89 = vmatprep.subr.mxu0 0.0
    %90 = vmatpush1.msra.mxu0 %v44
    %91 = vmatprep.subr.mxu0 0.0
    %92 = vmatpush1.msra.mxu0 %v45
    %93 = vmatprep.subr.mxu0 0.0
    %94 = vmatpush1.msra.mxu0 0.0
    %95 = vmatprep.subr.mxu0 0.0
    %96 = vmatpush1.msra.mxu0 0.0
    %97 = vmatprep.subr.mxu0 0.0
    %98 = vmatpush1.msra.mxu0 0.0
    %99 = vmatprep.subr.mxu0 0.0
    %100 = vmatpush1.msra.mxu0 0.0
    %101 = vmatprep.subr.mxu0 0.0
    %102 = vmatpush1.msra.mxu0 0.0
    %103 = vmatprep.subr.mxu0 0.0
    %104 = vmatpush1.msra.mxu0 0.0
    %105 = vmatprep.subr.mxu0 0.0
    %106 = vmatpush1.msra.mxu0 0.0
    %107 = vmatprep.subr.mxu0 0.0
    %108 = vmatpush1.msra.mxu0 0.0
    %109 = vmatprep.subr.mxu0 0.0
    %110 = vmatpush1.msra.mxu0 0.0
    %111 = vmatprep.subr.mxu0 0.0
    %112 = vmatpush1.msra.mxu0 0.0
    %113 = vmatprep.subr.mxu0 0.0
    %114 = vmatpush1.msra.mxu0 0.0
    %115 = vmatprep.subr.mxu0 0.0
    %116 = vmatpush1.msra.mxu0 0.0
    %117 = vmatprep.subr.mxu0 0.0
    %118 = vmatpush1.msra.mxu0 0.0
    %119 = vmatprep.subr.mxu0 0.0
    %120 = vmatpush1.msra.mxu0 0.0
    %121 = vmatprep.subr.mxu0 0.0
    %122 = vmatpush1.msra.mxu0 0.0
    %123 = vmatprep.subr.mxu0 0.0
    %124 = vmatpush1.msra.mxu0 0.0
    %125 = vmatprep.mubr.f32.mxu0 0.0
    %126 = vmatmul.mubr.f32.gmra.mrb[0].mxu0 %v56
    %v127 = vpop.f32.mrb[0].mxu0
    %v128 = vadd.f32 %v60, %v127
    %v129 = vpop.f32.mrb[0].mxu0
    %130 = vdwg.mxu0
    %v131 = vlaneseq
    %v132 = vand.u32 %v131, 127
    %vm133 = vcmp.ge.s32.totalorder %v132, 64
    %vm134 = vcmp.lt.s32.totalorder %v132, 96
    %vm135 = vmand %vm133, %vm134
    %v136 = vsel %vm135, 1.0, 0.5
    %v137 = vld [vmem:[%s2] sm:$0x1]
    %v138 = vld [vmem:[%s2 + $0x1] sm:$0x1]
    %vm139 = vcmask 261120
    %v141 = vsel %vm139, %v137, 0
    %143 = vmatprep.subr.mxu0 0.0
    %144 = vmatpush1.msra.mxu0 %v46
    %145 = vmatprep.subr.mxu0 0.0
    %146 = vmatpush1.msra.mxu0 %v47
    %147 = vmatprep.subr.mxu0 0.0
    %148 = vmatpush1.msra.mxu0 %v48
    %149 = vmatprep.subr.mxu0 0.0
    %150 = vmatpush1.msra.mxu0 %v49
    %151 = vmatprep.subr.mxu0 0.0
    %152 = vmatpush1.msra.mxu0 0.0
    %153 = vmatprep.subr.mxu0 0.0
    %154 = vmatpush1.msra.mxu0 0.0
    %155 = vmatprep.subr.mxu0 0.0
    %156 = vmatpush1.msra.mxu0 0.0
    %157 = vmatprep.subr.mxu0 0.0
    %158 = vmatpush1.msra.mxu0 0.0
    %159 = vmatprep.subr.mxu0 0.0
    %160 = vmatpush1.msra.mxu0 0.0
    %161 = vmatprep.subr.mxu0 0.0
    %162 = vmatpush1.msra.mxu0 0.0
    %163 = vmatprep.subr.mxu0 0.0
    %164 = vmatpush1.msra.mxu0 0.0
    %165 = vmatprep.subr.mxu0 0.0
    %166 = vmatpush1.msra.mxu0 0.0
    %167 = vmatprep.subr.mxu0 0.0
    %168 = vmatpush1.msra.mxu0 0.0
    %169 = vmatprep.subr.mxu0 0.0
    %170 = vmatpush1.msra.mxu0 0.0
    %171 = vmatprep.subr.mxu0 0.0
    %172 = vmatpush1.msra.mxu0 0.0
    %173 = vmatprep.subr.mxu0 0.0
    %174 = vmatpush1.msra.mxu0 0.0
    %175 = vmatprep.subr.mxu0 0.0
    %176 = vmatpush1.msra.mxu0 0.0
    %177 = vmatprep.subr.mxu0 0.0
    %178 = vmatpush1.msra.mxu0 0.0
    %179 = vmatprep.subr.mxu0 0.0
    %180 = vmatpush1.msra.mxu0 0.0
    %181 = vmatprep.subr.mxu0 0.0
    %182 = vmatpush1.msra.mxu0 0.0
    %183 = vmatprep.subr.mxu0 0.0
    %184 = vmatpush1.msra.mxu0 0.0
    %185 = vmatprep.subr.mxu0 0.0
    %186 = vmatpush1.msra.mxu0 0.0
    %187 = vmatprep.subr.mxu0 0.0
    %188 = vmatpush1.msra.mxu0 0.0
    %189 = vmatprep.subr.mxu0 0.0
    %190 = vmatpush1.msra.mxu0 0.0
    %191 = vmatprep.subr.mxu0 0.0
    %192 = vmatpush1.msra.mxu0 0.0
    %193 = vmatprep.subr.mxu0 0.0
    %194 = vmatpush1.msra.mxu0 0.0
    %195 = vmatprep.subr.mxu0 0.0
    %196 = vmatpush1.msra.mxu0 0.0
    %197 = vmatprep.subr.mxu0 0.0
    %198 = vmatpush1.msra.mxu0 0.0
    %199 = vmatprep.subr.mxu0 0.0
    %200 = vmatpush1.msra.mxu0 0.0
    %201 = vmatprep.subr.mxu0 0.0
    %202 = vmatpush1.msra.mxu0 0.0
    %203 = vmatprep.subr.mxu0 0.0
    %204 = vmatpush1.msra.mxu0 0.0
    %205 = vmatprep.subr.mxu0 0.0
    %206 = vmatpush1.msra.mxu0 0.0
    %207 = vmatprep.mubr.f32.mxu0 0.0
    %208 = vmatmul.mubr.f32.gmra.mrb[0].mxu0 %v141
    %v209 = vpop.f32.mrb[0].mxu0
    %v210 = vadd.f32 0.0, %v209
    %v211 = vpop.f32.mrb[0].mxu0
    %212 = vdwg.mxu0
    %v213 = vadd.f32 %v128, %v210
    %v214 = vmul.f32 %v213, %v136
    %v215 = vtanh.pop %v214
    %v216 = vmul.f32 %v215, 0.5
    %v217 = vadd.f32 %v216, 0.5
    %v218 = vsel %vm135, %v215, %v217
    %220 = vrot.lane.b32.xlu0 %v138, 32
    %v221 = vpop.permute.xlu0 %220
    %v223 = vmul.f32 %v218, %v221
    %225 = vrot.lane.b32.xlu0 %v218, 64
    %v226 = vpop.permute.xlu0 %225
    %v228 = vmul.f32 %v218, %v226
    %230 = vrot.lane.b32.xlu0 %v228, 32
    %v231 = vpop.permute.xlu0 %230
    %v233 = vadd.f32 %v223, %v231
    %v234 = vtanh.pop %v233
    %236 = vrot.lane.b32.xlu0 %v234, 64
    %v237 = vpop.permute.xlu0 %236
    %v239 = vmul.f32 %v218, %v237
    %241 = vrot.lane.b32.xlu0 %v239, 32
    %v242 = vpop.permute.xlu0 %241
    %v243 = vsel %vm139, %v242, 0
    %245 = vmatprep.subr.mxu0 0.0
    %246 = vmatpush1.msra.mxu0 %v46
    %247 = vmatprep.subr.mxu0 0.0
    %248 = vmatpush1.msra.mxu0 %v47
    %249 = vmatprep.subr.mxu0 0.0
    %250 = vmatpush1.msra.mxu0 %v48
    %251 = vmatprep.subr.mxu0 0.0
    %252 = vmatpush1.msra.mxu0 %v49
    %253 = vmatprep.subr.mxu0 0.0
    %254 = vmatpush1.msra.mxu0 0.0
    %255 = vmatprep.subr.mxu0 0.0
    %256 = vmatpush1.msra.mxu0 0.0
    %257 = vmatprep.subr.mxu0 0.0
    %258 = vmatpush1.msra.mxu0 0.0
    %259 = vmatprep.subr.mxu0 0.0
    %260 = vmatpush1.msra.mxu0 0.0
    %261 = vmatprep.subr.mxu0 0.0
    %262 = vmatpush1.msra.mxu0 0.0
    %263 = vmatprep.subr.mxu0 0.0
    %264 = vmatpush1.msra.mxu0 0.0
    %265 = vmatprep.subr.mxu0 0.0
    %266 = vmatpush1.msra.mxu0 0.0
    %267 = vmatprep.subr.mxu0 0.0
    %268 = vmatpush1.msra.mxu0 0.0
    %269 = vmatprep.subr.mxu0 0.0
    %270 = vmatpush1.msra.mxu0 0.0
    %271 = vmatprep.subr.mxu0 0.0
    %272 = vmatpush1.msra.mxu0 0.0
    %273 = vmatprep.subr.mxu0 0.0
    %274 = vmatpush1.msra.mxu0 0.0
    %275 = vmatprep.subr.mxu0 0.0
    %276 = vmatpush1.msra.mxu0 0.0
    %277 = vmatprep.subr.mxu0 0.0
    %278 = vmatpush1.msra.mxu0 0.0
    %279 = vmatprep.subr.mxu0 0.0
    %280 = vmatpush1.msra.mxu0 0.0
    %281 = vmatprep.subr.mxu0 0.0
    %282 = vmatpush1.msra.mxu0 0.0
    %283 = vmatprep.subr.mxu0 0.0
    %284 = vmatpush1.msra.mxu0 0.0
    %285 = vmatprep.subr.mxu0 0.0
    %286 = vmatpush1.msra.mxu0 0.0
    %287 = vmatprep.subr.mxu0 0.0
    %288 = vmatpush1.msra.mxu0 0.0
    %289 = vmatprep.subr.mxu0 0.0
    %290 = vmatpush1.msra.mxu0 0.0
    %291 = vmatprep.subr.mxu0 0.0
    %292 = vmatpush1.msra.mxu0 0.0
    %293 = vmatprep.subr.mxu0 0.0
    %294 = vmatpush1.msra.mxu0 0.0
    %295 = vmatprep.subr.mxu0 0.0
    %296 = vmatpush1.msra.mxu0 0.0
    %297 = vmatprep.subr.mxu0 0.0
    %298 = vmatpush1.msra.mxu0 0.0
    %299 = vmatprep.subr.mxu0 0.0
    %300 = vmatpush1.msra.mxu0 0.0
    %301 = vmatprep.subr.mxu0 0.0
    %302 = vmatpush1.msra.mxu0 0.0
    %303 = vmatprep.subr.mxu0 0.0
    %304 = vmatpush1.msra.mxu0 0.0
    %305 = vmatprep.subr.mxu0 0.0
    %306 = vmatpush1.msra.mxu0 0.0
    %307 = vmatprep.subr.mxu0 0.0
    %308 = vmatpush1.msra.mxu0 0.0
    %309 = vmatprep.mubr.f32.mxu0 0.0
    %310 = vmatmul.mubr.f32.gmra.mrb[0].mxu0 %v243
    %v311 = vpop.f32.mrb[0].mxu0
    %v312 = vadd.f32 0.0, %v311
    %v313 = vpop.f32.mrb[0].mxu0
    %314 = vdwg.mxu0
    %v316 = vrot.slane %v312, 7
    %v318 = vadd.f32 %v128, %v316
    %v319 = vmul.f32 %v318, %v136
    %v320 = vtanh.pop %v319
    %v321 = vmul.f32 %v320, 0.5
    %v322 = vadd.f32 %v321, 0.5
    %v323 = vsel %vm135, %v320, %v322
    %v325 = vrot.slane %v233, 7
    %v327 = vmul.f32 %v323, %v325
    %329 = vrot.lane.b32.xlu0 %v323, 64
    %v330 = vpop.permute.xlu0 %329
    %v332 = vmul.f32 %v323, %v330
    %334 = vrot.lane.b32.xlu0 %v332, 32
    %v335 = vpop.permute.xlu0 %334
    %v337 = vadd.f32 %v327, %v335
    %v338 = vtanh.pop %v337
    %340 = vrot.lane.b32.xlu0 %v338, 64
    %v341 = vpop.permute.xlu0 %340
    %v343 = vmul.f32 %v323, %v341
    %v345 = vrot.slane %v343, 1
    %346 = vrot.lane.b32.xlu0 %v345, 32
    %v347 = vpop.permute.xlu0 %346
    %v348 = vsel %vm139, %v347, 0
    %350 = vmatprep.subr.mxu0 0.0
    %351 = vmatpush1.msra.mxu0 %v46
    %352 = vmatprep.subr.mxu0 0.0
    %353 = vmatpush1.msra.mxu0 %v47
    %354 = vmatprep.subr.mxu0 0.0
    %355 = vmatpush1.msra.mxu0 %v48
    %356 = vmatprep.subr.mxu0 0.0
    %357 = vmatpush1.msra.mxu0 %v49
    %358 = vmatprep.subr.mxu0 0.0
    %359 = vmatpush1.msra.mxu0 0.0
    %360 = vmatprep.subr.mxu0 0.0
    %361 = vmatpush1.msra.mxu0 0.0
    %362 = vmatprep.subr.mxu0 0.0
    %363 = vmatpush1.msra.mxu0 0.0
    %364 = vmatprep.subr.mxu0 0.0
    %365 = vmatpush1.msra.mxu0 0.0
    %366 = vmatprep.subr.mxu0 0.0
    %367 = vmatpush1.msra.mxu0 0.0
    %368 = vmatprep.subr.mxu0 0.0
    %369 = vmatpush1.msra.mxu0 0.0
    %370 = vmatprep.subr.mxu0 0.0
    %371 = vmatpush1.msra.mxu0 0.0
    %372 = vmatprep.subr.mxu0 0.0
    %373 = vmatpush1.msra.mxu0 0.0
    %374 = vmatprep.subr.mxu0 0.0
    %375 = vmatpush1.msra.mxu0 0.0
    %376 = vmatprep.subr.mxu0 0.0
    %377 = vmatpush1.msra.mxu0 0.0
    %378 = vmatprep.subr.mxu0 0.0
    %379 = vmatpush1.msra.mxu0 0.0
    %380 = vmatprep.subr.mxu0 0.0
    %381 = vmatpush1.msra.mxu0 0.0
    %382 = vmatprep.subr.mxu0 0.0
    %383 = vmatpush1.msra.mxu0 0.0
    %384 = vmatprep.subr.mxu0 0.0
    %385 = vmatpush1.msra.mxu0 0.0
    %386 = vmatprep.subr.mxu0 0.0
    %387 = vmatpush1.msra.mxu0 0.0
    %388 = vmatprep.subr.mxu0 0.0
    %389 = vmatpush1.msra.mxu0 0.0
    %390 = vmatprep.subr.mxu0 0.0
    %391 = vmatpush1.msra.mxu0 0.0
    %392 = vmatprep.subr.mxu0 0.0
    %393 = vmatpush1.msra.mxu0 0.0
    %394 = vmatprep.subr.mxu0 0.0
    %395 = vmatpush1.msra.mxu0 0.0
    %396 = vmatprep.subr.mxu0 0.0
    %397 = vmatpush1.msra.mxu0 0.0
    %398 = vmatprep.subr.mxu0 0.0
    %399 = vmatpush1.msra.mxu0 0.0
    %400 = vmatprep.subr.mxu0 0.0
    %401 = vmatpush1.msra.mxu0 0.0
    %402 = vmatprep.subr.mxu0 0.0
    %403 = vmatpush1.msra.mxu0 0.0
    %404 = vmatprep.subr.mxu0 0.0
    %405 = vmatpush1.msra.mxu0 0.0
    %406 = vmatprep.subr.mxu0 0.0
    %407 = vmatpush1.msra.mxu0 0.0
    %408 = vmatprep.subr.mxu0 0.0
    %409 = vmatpush1.msra.mxu0 0.0
    %410 = vmatprep.subr.mxu0 0.0
    %411 = vmatpush1.msra.mxu0 0.0
    %412 = vmatprep.subr.mxu0 0.0
    %413 = vmatpush1.msra.mxu0 0.0
    %414 = vmatprep.mubr.f32.mxu0 0.0
    %415 = vmatmul.mubr.f32.gmra.mrb[0].mxu0 %v348
    %v416 = vpop.f32.mrb[0].mxu0
    %v417 = vadd.f32 0.0, %v416
    %v418 = vpop.f32.mrb[0].mxu0
    %419 = vdwg.mxu0
    %v421 = vrot.slane %v417, 6
    %v423 = vadd.f32 %v128, %v421
    %v424 = vmul.f32 %v423, %v136
    %v425 = vtanh.pop %v424
    %v426 = vmul.f32 %v425, 0.5
    %v427 = vadd.f32 %v426, 0.5
    %v428 = vsel %vm135, %v425, %v427
    %v430 = vrot.slane %v337, 7
    %v432 = vmul.f32 %v428, %v430
    %434 = vrot.lane.b32.xlu0 %v428, 64
    %v435 = vpop.permute.xlu0 %434
    %v437 = vmul.f32 %v428, %v435
    %439 = vrot.lane.b32.xlu0 %v437, 32
    %v440 = vpop.permute.xlu0 %439
    %v442 = vadd.f32 %v432, %v440
    %v443 = vtanh.pop %v442
    %445 = vrot.lane.b32.xlu0 %v443, 64
    %v446 = vpop.permute.xlu0 %445
    %v448 = vmul.f32 %v428, %v446
    %v450 = vrot.slane %v448, 2
    %451 = vrot.lane.b32.xlu0 %v450, 32
    %v452 = vpop.permute.xlu0 %451
    %v453 = vsel %vm139, %v452, 0
    %455 = vmatprep.subr.mxu0 0.0
    %456 = vmatpush1.msra.mxu0 %v46
    %457 = vmatprep.subr.mxu0 0.0
    %458 = vmatpush1.msra.mxu0 %v47
    %459 = vmatprep.subr.mxu0 0.0
    %460 = vmatpush1.msra.mxu0 %v48
    %461 = vmatprep.subr.mxu0 0.0
    %462 = vmatpush1.msra.mxu0 %v49
    %463 = vmatprep.subr.mxu0 0.0
    %464 = vmatpush1.msra.mxu0 0.0
    %465 = vmatprep.subr.mxu0 0.0
    %466 = vmatpush1.msra.mxu0 0.0
    %467 = vmatprep.subr.mxu0 0.0
    %468 = vmatpush1.msra.mxu0 0.0
    %469 = vmatprep.subr.mxu0 0.0
    %470 = vmatpush1.msra.mxu0 0.0
    %471 = vmatprep.subr.mxu0 0.0
    %472 = vmatpush1.msra.mxu0 0.0
    %473 = vmatprep.subr.mxu0 0.0
    %474 = vmatpush1.msra.mxu0 0.0
    %475 = vmatprep.subr.mxu0 0.0
    %476 = vmatpush1.msra.mxu0 0.0
    %477 = vmatprep.subr.mxu0 0.0
    %478 = vmatpush1.msra.mxu0 0.0
    %479 = vmatprep.subr.mxu0 0.0
    %480 = vmatpush1.msra.mxu0 0.0
    %481 = vmatprep.subr.mxu0 0.0
    %482 = vmatpush1.msra.mxu0 0.0
    %483 = vmatprep.subr.mxu0 0.0
    %484 = vmatpush1.msra.mxu0 0.0
    %485 = vmatprep.subr.mxu0 0.0
    %486 = vmatpush1.msra.mxu0 0.0
    %487 = vmatprep.subr.mxu0 0.0
    %488 = vmatpush1.msra.mxu0 0.0
    %489 = vmatprep.subr.mxu0 0.0
    %490 = vmatpush1.msra.mxu0 0.0
    %491 = vmatprep.subr.mxu0 0.0
    %492 = vmatpush1.msra.mxu0 0.0
    %493 = vmatprep.subr.mxu0 0.0
    %494 = vmatpush1.msra.mxu0 0.0
    %495 = vmatprep.subr.mxu0 0.0
    %496 = vmatpush1.msra.mxu0 0.0
    %497 = vmatprep.subr.mxu0 0.0
    %498 = vmatpush1.msra.mxu0 0.0
    %499 = vmatprep.subr.mxu0 0.0
    %500 = vmatpush1.msra.mxu0 0.0
    %501 = vmatprep.subr.mxu0 0.0
    %502 = vmatpush1.msra.mxu0 0.0
    %503 = vmatprep.subr.mxu0 0.0
    %504 = vmatpush1.msra.mxu0 0.0
    %505 = vmatprep.subr.mxu0 0.0
    %506 = vmatpush1.msra.mxu0 0.0
    %507 = vmatprep.subr.mxu0 0.0
    %508 = vmatpush1.msra.mxu0 0.0
    %509 = vmatprep.subr.mxu0 0.0
    %510 = vmatpush1.msra.mxu0 0.0
    %511 = vmatprep.subr.mxu0 0.0
    %512 = vmatpush1.msra.mxu0 0.0
    %513 = vmatprep.subr.mxu0 0.0
    %514 = vmatpush1.msra.mxu0 0.0
    %515 = vmatprep.subr.mxu0 0.0
    %516 = vmatpush1.msra.mxu0 0.0
    %517 = vmatprep.subr.mxu0 0.0
    %518 = vmatpush1.msra.mxu0 0.0
    %519 = vmatprep.mubr.f32.mxu0 0.0
    %520 = vmatmul.mubr.f32.gmra.mrb[0].mxu0 %v453
    %v521 = vpop.f32.mrb[0].mxu0
    %v522 = vadd.f32 0.0, %v521
    %v523 = vpop.f32.mrb[0].mxu0
    %524 = vdwg.mxu0
    %v526 = vrot.slane %v522, 5
    %v528 = vadd.f32 %v128, %v526
    %v529 = vmul.f32 %v528, %v136
    %v530 = vtanh.pop %v529
    %v531 = vmul.f32 %v530, 0.5
    %v532 = vadd.f32 %v531, 0.5
    %v533 = vsel %vm135, %v530, %v532
    %v535 = vrot.slane %v442, 7
    %v537 = vmul.f32 %v533, %v535
    %539 = vrot.lane.b32.xlu0 %v533, 64
    %v540 = vpop.permute.xlu0 %539
    %v542 = vmul.f32 %v533, %v540
    %544 = vrot.lane.b32.xlu0 %v542, 32
    %v545 = vpop.permute.xlu0 %544
    %v547 = vadd.f32 %v537, %v545
    %v548 = vtanh.pop %v547
    %550 = vrot.lane.b32.xlu0 %v548, 64
    %v551 = vpop.permute.xlu0 %550
    %v553 = vmul.f32 %v533, %v551
    %v555 = vrot.slane %v553, 3
    %556 = vrot.lane.b32.xlu0 %v555, 32
    %v557 = vpop.permute.xlu0 %556
    %v558 = vsel %vm139, %v557, 0
    %560 = vmatprep.subr.mxu0 0.0
    %561 = vmatpush1.msra.mxu0 %v46
    %562 = vmatprep.subr.mxu0 0.0
    %563 = vmatpush1.msra.mxu0 %v47
    %564 = vmatprep.subr.mxu0 0.0
    %565 = vmatpush1.msra.mxu0 %v48
    %566 = vmatprep.subr.mxu0 0.0
    %567 = vmatpush1.msra.mxu0 %v49
    %568 = vmatprep.subr.mxu0 0.0
    %569 = vmatpush1.msra.mxu0 0.0
    %570 = vmatprep.subr.mxu0 0.0
    %571 = vmatpush1.msra.mxu0 0.0
    %572 = vmatprep.subr.mxu0 0.0
    %573 = vmatpush1.msra.mxu0 0.0
    %574 = vmatprep.subr.mxu0 0.0
    %575 = vmatpush1.msra.mxu0 0.0
    %576 = vmatprep.subr.mxu0 0.0
    %577 = vmatpush1.msra.mxu0 0.0
    %578 = vmatprep.subr.mxu0 0.0
    %579 = vmatpush1.msra.mxu0 0.0
    %580 = vmatprep.subr.mxu0 0.0
    %581 = vmatpush1.msra.mxu0 0.0
    %582 = vmatprep.subr.mxu0 0.0
    %583 = vmatpush1.msra.mxu0 0.0
    %584 = vmatprep.subr.mxu0 0.0
    %585 = vmatpush1.msra.mxu0 0.0
    %586 = vmatprep.subr.mxu0 0.0
    %587 = vmatpush1.msra.mxu0 0.0
    %588 = vmatprep.subr.mxu0 0.0
    %589 = vmatpush1.msra.mxu0 0.0
    %590 = vmatprep.subr.mxu0 0.0
    %591 = vmatpush1.msra.mxu0 0.0
    %592 = vmatprep.subr.mxu0 0.0
    %593 = vmatpush1.msra.mxu0 0.0
    %594 = vmatprep.subr.mxu0 0.0
    %595 = vmatpush1.msra.mxu0 0.0
    %596 = vmatprep.subr.mxu0 0.0
    %597 = vmatpush1.msra.mxu0 0.0
    %598 = vmatprep.subr.mxu0 0.0
    %599 = vmatpush1.msra.mxu0 0.0
    %600 = vmatprep.subr.mxu0 0.0
    %601 = vmatpush1.msra.mxu0 0.0
    %602 = vmatprep.subr.mxu0 0.0
    %603 = vmatpush1.msra.mxu0 0.0
    %604 = vmatprep.subr.mxu0 0.0
    %605 = vmatpush1.msra.mxu0 0.0
    %606 = vmatprep.subr.mxu0 0.0
    %607 = vmatpush1.msra.mxu0 0.0
    %608 = vmatprep.subr.mxu0 0.0
    %609 = vmatpush1.msra.mxu0 0.0
    %610 = vmatprep.subr.mxu0 0.0
    %611 = vmatpush1.msra.mxu0 0.0
    %612 = vmatprep.subr.mxu0 0.0
    %613 = vmatpush1.msra.mxu0 0.0
    %614 = vmatprep.subr.mxu0 0.0
    %615 = vmatpush1.msra.mxu0 0.0
    %616 = vmatprep.subr.mxu0 0.0
    %617 = vmatpush1.msra.mxu0 0.0
    %618 = vmatprep.subr.mxu0 0.0
    %619 = vmatpush1.msra.mxu0 0.0
    %620 = vmatprep.subr.mxu0 0.0
    %621 = vmatpush1.msra.mxu0 0.0
    %622 = vmatprep.subr.mxu0 0.0
    %623 = vmatpush1.msra.mxu0 0.0
    %624 = vmatprep.mubr.f32.mxu0 0.0
    %625 = vmatmul.mubr.f32.gmra.mrb[0].mxu0 %v558
    %v626 = vpop.f32.mrb[0].mxu0
    %v627 = vadd.f32 0.0, %v626
    %v628 = vpop.f32.mrb[0].mxu0
    %629 = vdwg.mxu0
    %v631 = vrot.slane %v627, 4
    %v633 = vadd.f32 %v128, %v631
    %v634 = vmul.f32 %v633, %v136
    %v635 = vtanh.pop %v634
    %v636 = vmul.f32 %v635, 0.5
    %v637 = vadd.f32 %v636, 0.5
    %v638 = vsel %vm135, %v635, %v637
    %v640 = vrot.slane %v547, 7
    %v642 = vmul.f32 %v638, %v640
    %644 = vrot.lane.b32.xlu0 %v638, 64
    %v645 = vpop.permute.xlu0 %644
    %v647 = vmul.f32 %v638, %v645
    %649 = vrot.lane.b32.xlu0 %v647, 32
    %v650 = vpop.permute.xlu0 %649
    %v652 = vadd.f32 %v642, %v650
    %v653 = vtanh.pop %v652
    %655 = vrot.lane.b32.xlu0 %v653, 64
    %v656 = vpop.permute.xlu0 %655
    %v658 = vmul.f32 %v638, %v656
    %v660 = vrot.slane %v658, 4
    %661 = vrot.lane.b32.xlu0 %v660, 32
    %v662 = vpop.permute.xlu0 %661
    %v663 = vsel %vm139, %v662, 0
    %665 = vmatprep.subr.mxu0 0.0
    %666 = vmatpush1.msra.mxu0 %v46
    %667 = vmatprep.subr.mxu0 0.0
    %668 = vmatpush1.msra.mxu0 %v47
    %669 = vmatprep.subr.mxu0 0.0
    %670 = vmatpush1.msra.mxu0 %v48
    %671 = vmatprep.subr.mxu0 0.0
    %672 = vmatpush1.msra.mxu0 %v49
    %673 = vmatprep.subr.mxu0 0.0
    %674 = vmatpush1.msra.mxu0 0.0
    %675 = vmatprep.subr.mxu0 0.0
    %676 = vmatpush1.msra.mxu0 0.0
    %677 = vmatprep.subr.mxu0 0.0
    %678 = vmatpush1.msra.mxu0 0.0
    %679 = vmatprep.subr.mxu0 0.0
    %680 = vmatpush1.msra.mxu0 0.0
    %681 = vmatprep.subr.mxu0 0.0
    %682 = vmatpush1.msra.mxu0 0.0
    %683 = vmatprep.subr.mxu0 0.0
    %684 = vmatpush1.msra.mxu0 0.0
    %685 = vmatprep.subr.mxu0 0.0
    %686 = vmatpush1.msra.mxu0 0.0
    %687 = vmatprep.subr.mxu0 0.0
    %688 = vmatpush1.msra.mxu0 0.0
    %689 = vmatprep.subr.mxu0 0.0
    %690 = vmatpush1.msra.mxu0 0.0
    %691 = vmatprep.subr.mxu0 0.0
    %692 = vmatpush1.msra.mxu0 0.0
    %693 = vmatprep.subr.mxu0 0.0
    %694 = vmatpush1.msra.mxu0 0.0
    %695 = vmatprep.subr.mxu0 0.0
    %696 = vmatpush1.msra.mxu0 0.0
    %697 = vmatprep.subr.mxu0 0.0
    %698 = vmatpush1.msra.mxu0 0.0
    %699 = vmatprep.subr.mxu0 0.0
    %700 = vmatpush1.msra.mxu0 0.0
    %701 = vmatprep.subr.mxu0 0.0
    %702 = vmatpush1.msra.mxu0 0.0
    %703 = vmatprep.subr.mxu0 0.0
    %704 = vmatpush1.msra.mxu0 0.0
    %705 = vmatprep.subr.mxu0 0.0
    %706 = vmatpush1.msra.mxu0 0.0
    %707 = vmatprep.subr.mxu0 0.0
    %708 = vmatpush1.msra.mxu0 0.0
    %709 = vmatprep.subr.mxu0 0.0
    %710 = vmatpush1.msra.mxu0 0.0
    %711 = vmatprep.subr.mxu0 0.0
    %712 = vmatpush1.msra.mxu0 0.0
    %713 = vmatprep.subr.mxu0 0.0
    %714 = vmatpush1.msra.mxu0 0.0
    %715 = vmatprep.subr.mxu0 0.0
    %716 = vmatpush1.msra.mxu0 0.0
    %717 = vmatprep.subr.mxu0 0.0
    %718 = vmatpush1.msra.mxu0 0.0
    %719 = vmatprep.subr.mxu0 0.0
    %720 = vmatpush1.msra.mxu0 0.0
    %721 = vmatprep.subr.mxu0 0.0
    %722 = vmatpush1.msra.mxu0 0.0
    %723 = vmatprep.subr.mxu0 0.0
    %724 = vmatpush1.msra.mxu0 0.0
    %725 = vmatprep.subr.mxu0 0.0
    %726 = vmatpush1.msra.mxu0 0.0
    %727 = vmatprep.subr.mxu0 0.0
    %728 = vmatpush1.msra.mxu0 0.0
    %729 = vmatprep.mubr.f32.mxu0 0.0
    %730 = vmatmul.mubr.f32.gmra.mrb[0].mxu0 %v663
    %v731 = vpop.f32.mrb[0].mxu0
    %v732 = vadd.f32 0.0, %v731
    %v733 = vpop.f32.mrb[0].mxu0
    %734 = vdwg.mxu0
    %v736 = vrot.slane %v732, 3
    %v738 = vadd.f32 %v128, %v736
    %v739 = vmul.f32 %v738, %v136
    %v740 = vtanh.pop %v739
    %v741 = vmul.f32 %v740, 0.5
    %v742 = vadd.f32 %v741, 0.5
    %v743 = vsel %vm135, %v740, %v742
    %v745 = vrot.slane %v652, 7
    %v747 = vmul.f32 %v743, %v745
    %749 = vrot.lane.b32.xlu0 %v743, 64
    %v750 = vpop.permute.xlu0 %749
    %v752 = vmul.f32 %v743, %v750
    %754 = vrot.lane.b32.xlu0 %v752, 32
    %v755 = vpop.permute.xlu0 %754
    %v757 = vadd.f32 %v747, %v755
    %v758 = vtanh.pop %v757
    %760 = vrot.lane.b32.xlu0 %v758, 64
    %v761 = vpop.permute.xlu0 %760
    %v763 = vmul.f32 %v743, %v761
    %v765 = vrot.slane %v763, 5
    %766 = vrot.lane.b32.xlu0 %v765, 32
    %v767 = vpop.permute.xlu0 %766
    %v768 = vsel %vm139, %v767, 0
    %770 = vmatprep.subr.mxu0 0.0
    %771 = vmatpush1.msra.mxu0 %v46
    %772 = vmatprep.subr.mxu0 0.0
    %773 = vmatpush1.msra.mxu0 %v47
    %774 = vmatprep.subr.mxu0 0.0
    %775 = vmatpush1.msra.mxu0 %v48
    %776 = vmatprep.subr.mxu0 0.0
    %777 = vmatpush1.msra.mxu0 %v49
    %778 = vmatprep.subr.mxu0 0.0
    %779 = vmatpush1.msra.mxu0 0.0
    %780 = vmatprep.subr.mxu0 0.0
    %781 = vmatpush1.msra.mxu0 0.0
    %782 = vmatprep.subr.mxu0 0.0
    %783 = vmatpush1.msra.mxu0 0.0
    %784 = vmatprep.subr.mxu0 0.0
    %785 = vmatpush1.msra.mxu0 0.0
    %786 = vmatprep.subr.mxu0 0.0
    %787 = vmatpush1.msra.mxu0 0.0
    %788 = vmatprep.subr.mxu0 0.0
    %789 = vmatpush1.msra.mxu0 0.0
    %790 = vmatprep.subr.mxu0 0.0
    %791 = vmatpush1.msra.mxu0 0.0
    %792 = vmatprep.subr.mxu0 0.0
    %793 = vmatpush1.msra.mxu0 0.0
    %794 = vmatprep.subr.mxu0 0.0
    %795 = vmatpush1.msra.mxu0 0.0
    %796 = vmatprep.subr.mxu0 0.0
    %797 = vmatpush1.msra.mxu0 0.0
    %798 = vmatprep.subr.mxu0 0.0
    %799 = vmatpush1.msra.mxu0 0.0
    %800 = vmatprep.subr.mxu0 0.0
    %801 = vmatpush1.msra.mxu0 0.0
    %802 = vmatprep.subr.mxu0 0.0
    %803 = vmatpush1.msra.mxu0 0.0
    %804 = vmatprep.subr.mxu0 0.0
    %805 = vmatpush1.msra.mxu0 0.0
    %806 = vmatprep.subr.mxu0 0.0
    %807 = vmatpush1.msra.mxu0 0.0
    %808 = vmatprep.subr.mxu0 0.0
    %809 = vmatpush1.msra.mxu0 0.0
    %810 = vmatprep.subr.mxu0 0.0
    %811 = vmatpush1.msra.mxu0 0.0
    %812 = vmatprep.subr.mxu0 0.0
    %813 = vmatpush1.msra.mxu0 0.0
    %814 = vmatprep.subr.mxu0 0.0
    %815 = vmatpush1.msra.mxu0 0.0
    %816 = vmatprep.subr.mxu0 0.0
    %817 = vmatpush1.msra.mxu0 0.0
    %818 = vmatprep.subr.mxu0 0.0
    %819 = vmatpush1.msra.mxu0 0.0
    %820 = vmatprep.subr.mxu0 0.0
    %821 = vmatpush1.msra.mxu0 0.0
    %822 = vmatprep.subr.mxu0 0.0
    %823 = vmatpush1.msra.mxu0 0.0
    %824 = vmatprep.subr.mxu0 0.0
    %825 = vmatpush1.msra.mxu0 0.0
    %826 = vmatprep.subr.mxu0 0.0
    %827 = vmatpush1.msra.mxu0 0.0
    %828 = vmatprep.subr.mxu0 0.0
    %829 = vmatpush1.msra.mxu0 0.0
    %830 = vmatprep.subr.mxu0 0.0
    %831 = vmatpush1.msra.mxu0 0.0
    %832 = vmatprep.subr.mxu0 0.0
    %833 = vmatpush1.msra.mxu0 0.0
    %834 = vmatprep.mubr.f32.mxu0 0.0
    %835 = vmatmul.mubr.f32.gmra.mrb[0].mxu0 %v768
    %v836 = vpop.f32.mrb[0].mxu0
    %v837 = vadd.f32 0.0, %v836
    %v838 = vpop.f32.mrb[0].mxu0
    %839 = vdwg.mxu0
    %v841 = vrot.slane %v837, 2
    %v843 = vadd.f32 %v128, %v841
    %v844 = vmul.f32 %v843, %v136
    %v845 = vtanh.pop %v844
    %v846 = vmul.f32 %v845, 0.5
    %v847 = vadd.f32 %v846, 0.5
    %v848 = vsel %vm135, %v845, %v847
    %v850 = vrot.slane %v757, 7
    %v852 = vmul.f32 %v848, %v850
    %854 = vrot.lane.b32.xlu0 %v848, 64
    %v855 = vpop.permute.xlu0 %854
    %v857 = vmul.f32 %v848, %v855
    %859 = vrot.lane.b32.xlu0 %v857, 32
    %v860 = vpop.permute.xlu0 %859
    %v862 = vadd.f32 %v852, %v860
    %v863 = vtanh.pop %v862
    %865 = vrot.lane.b32.xlu0 %v863, 64
    %v866 = vpop.permute.xlu0 %865
    %v868 = vmul.f32 %v848, %v866
    %v870 = vrot.slane %v868, 6
    %871 = vrot.lane.b32.xlu0 %v870, 32
    %v872 = vpop.permute.xlu0 %871
    %v873 = vsel %vm139, %v872, 0
    %875 = vmatprep.subr.mxu0 0.0
    %876 = vmatpush1.msra.mxu0 %v46
    %877 = vmatprep.subr.mxu0 0.0
    %878 = vmatpush1.msra.mxu0 %v47
    %879 = vmatprep.subr.mxu0 0.0
    %880 = vmatpush1.msra.mxu0 %v48
    %881 = vmatprep.subr.mxu0 0.0
    %882 = vmatpush1.msra.mxu0 %v49
    %883 = vmatprep.subr.mxu0 0.0
    %884 = vmatpush1.msra.mxu0 0.0
    %885 = vmatprep.subr.mxu0 0.0
    %886 = vmatpush1.msra.mxu0 0.0
    %887 = vmatprep.subr.mxu0 0.0
    %888 = vmatpush1.msra.mxu0 0.0
    %889 = vmatprep.subr.mxu0 0.0
    %890 = vmatpush1.msra.mxu0 0.0
    %891 = vmatprep.subr.mxu0 0.0
    %892 = vmatpush1.msra.mxu0 0.0
    %893 = vmatprep.subr.mxu0 0.0
    %894 = vmatpush1.msra.mxu0 0.0
    %895 = vmatprep.subr.mxu0 0.0
    %896 = vmatpush1.msra.mxu0 0.0
    %897 = vmatprep.subr.mxu0 0.0
    %898 = vmatpush1.msra.mxu0 0.0
    %899 = vmatprep.subr.mxu0 0.0
    %900 = vmatpush1.msra.mxu0 0.0
    %901 = vmatprep.subr.mxu0 0.0
    %902 = vmatpush1.msra.mxu0 0.0
    %903 = vmatprep.subr.mxu0 0.0
    %904 = vmatpush1.msra.mxu0 0.0
    %905 = vmatprep.subr.mxu0 0.0
    %906 = vmatpush1.msra.mxu0 0.0
    %907 = vmatprep.subr.mxu0 0.0
    %908 = vmatpush1.msra.mxu0 0.0
    %909 = vmatprep.subr.mxu0 0.0
    %910 = vmatpush1.msra.mxu0 0.0
    %911 = vmatprep.subr.mxu0 0.0
    %912 = vmatpush1.msra.mxu0 0.0
    %913 = vmatprep.subr.mxu0 0.0
    %914 = vmatpush1.msra.mxu0 0.0
    %915 = vmatprep.subr.mxu0 0.0
    %916 = vmatpush1.msra.mxu0 0.0
    %917 = vmatprep.subr.mxu0 0.0
    %918 = vmatpush1.msra.mxu0 0.0
    %919 = vmatprep.subr.mxu0 0.0
    %920 = vmatpush1.msra.mxu0 0.0
    %921 = vmatprep.subr.mxu0 0.0
    %922 = vmatpush1.msra.mxu0 0.0
    %923 = vmatprep.subr.mxu0 0.0
    %924 = vmatpush1.msra.mxu0 0.0
    %925 = vmatprep.subr.mxu0 0.0
    %926 = vmatpush1.msra.mxu0 0.0
    %927 = vmatprep.subr.mxu0 0.0
    %928 = vmatpush1.msra.mxu0 0.0
    %929 = vmatprep.subr.mxu0 0.0
    %930 = vmatpush1.msra.mxu0 0.0
    %931 = vmatprep.subr.mxu0 0.0
    %932 = vmatpush1.msra.mxu0 0.0
    %933 = vmatprep.subr.mxu0 0.0
    %934 = vmatpush1.msra.mxu0 0.0
    %935 = vmatprep.subr.mxu0 0.0
    %936 = vmatpush1.msra.mxu0 0.0
    %937 = vmatprep.subr.mxu0 0.0
    %938 = vmatpush1.msra.mxu0 0.0
    %939 = vmatprep.mubr.f32.mxu0 0.0
    %940 = vmatmul.mubr.f32.gmra.mrb[0].mxu0 %v873
    %v941 = vpop.f32.mrb[0].mxu0
    %v942 = vadd.f32 0.0, %v941
    %v943 = vpop.f32.mrb[0].mxu0
    %944 = vdwg.mxu0
    %v946 = vrot.slane %v942, 1
    %v948 = vadd.f32 %v128, %v946
    %v949 = vmul.f32 %v948, %v136
    %v950 = vtanh.pop %v949
    %v951 = vmul.f32 %v950, 0.5
    %v952 = vadd.f32 %v951, 0.5
    %v953 = vsel %vm135, %v950, %v952
    %v955 = vrot.slane %v862, 7
    %v957 = vmul.f32 %v953, %v955
    %959 = vrot.lane.b32.xlu0 %v953, 64
    %v960 = vpop.permute.xlu0 %959
    %v962 = vmul.f32 %v953, %v960
    %964 = vrot.lane.b32.xlu0 %v962, 32
    %v965 = vpop.permute.xlu0 %964
    %v967 = vadd.f32 %v957, %v965
    %v968 = vtanh.pop %v967
    %970 = vrot.lane.b32.xlu0 %v968, 64
    %v971 = vpop.permute.xlu0 %970
    %v973 = vmul.f32 %v953, %v971
    %v975 = vrot.slane %v973, 7
    %976 = vrot.lane.b32.xlu0 %v975, 32
    %v977 = vpop.permute.xlu0 %976
    %v978 = vsel %vm139, %v977, 0
    %980 = vmatprep.subr.mxu0 0.0
    %981 = vmatpush1.msra.mxu0 %v51
    %982 = vmatprep.subr.mxu0 0.0
    %983 = vmatpush1.msra.mxu0 %v52
    %984 = vmatprep.subr.mxu0 0.0
    %985 = vmatpush1.msra.mxu0 %v53
    %986 = vmatprep.subr.mxu0 0.0
    %987 = vmatpush1.msra.mxu0 %v54
    %988 = vmatprep.subr.mxu0 0.0
    %989 = vmatpush1.msra.mxu0 0.0
    %990 = vmatprep.subr.mxu0 0.0
    %991 = vmatpush1.msra.mxu0 0.0
    %992 = vmatprep.subr.mxu0 0.0
    %993 = vmatpush1.msra.mxu0 0.0
    %994 = vmatprep.subr.mxu0 0.0
    %995 = vmatpush1.msra.mxu0 0.0
    %996 = vmatprep.subr.mxu0 0.0
    %997 = vmatpush1.msra.mxu0 0.0
    %998 = vmatprep.subr.mxu0 0.0
    %999 = vmatpush1.msra.mxu0 0.0
    %1000 = vmatprep.subr.mxu0 0.0
    %1001 = vmatpush1.msra.mxu0 0.0
    %1002 = vmatprep.subr.mxu0 0.0
    %1003 = vmatpush1.msra.mxu0 0.0
    %1004 = vmatprep.subr.mxu0 0.0
    %1005 = vmatpush1.msra.mxu0 0.0
    %1006 = vmatprep.subr.mxu0 0.0
    %1007 = vmatpush1.msra.mxu0 0.0
    %1008 = vmatprep.subr.mxu0 0.0
    %1009 = vmatpush1.msra.mxu0 0.0
    %1010 = vmatprep.subr.mxu0 0.0
    %1011 = vmatpush1.msra.mxu0 0.0
    %1012 = vmatprep.subr.mxu0 0.0
    %1013 = vmatpush1.msra.mxu0 0.0
    %1014 = vmatprep.subr.mxu0 0.0
    %1015 = vmatpush1.msra.mxu0 0.0
    %1016 = vmatprep.subr.mxu0 0.0
    %1017 = vmatpush1.msra.mxu0 0.0
    %1018 = vmatprep.subr.mxu0 0.0
    %1019 = vmatpush1.msra.mxu0 0.0
    %1020 = vmatprep.subr.mxu0 0.0
    %1021 = vmatpush1.msra.mxu0 0.0
    %1022 = vmatprep.subr.mxu0 0.0
    %1023 = vmatpush1.msra.mxu0 0.0
    %1024 = vmatprep.subr.mxu0 0.0
    %1025 = vmatpush1.msra.mxu0 0.0
    %1026 = vmatprep.subr.mxu0 0.0
    %1027 = vmatpush1.msra.mxu0 0.0
    %1028 = vmatprep.subr.mxu0 0.0
    %1029 = vmatpush1.msra.mxu0 0.0
    %1030 = vmatprep.subr.mxu0 0.0
    %1031 = vmatpush1.msra.mxu0 0.0
    %1032 = vmatprep.subr.mxu0 0.0
    %1033 = vmatpush1.msra.mxu0 0.0
    %1034 = vmatprep.subr.mxu0 0.0
    %1035 = vmatpush1.msra.mxu0 0.0
    %1036 = vmatprep.subr.mxu0 0.0
    %1037 = vmatpush1.msra.mxu0 0.0
    %1038 = vmatprep.subr.mxu0 0.0
    %1039 = vmatpush1.msra.mxu0 0.0
    %1040 = vmatprep.subr.mxu0 0.0
    %1041 = vmatpush1.msra.mxu0 0.0
    %1042 = vmatprep.subr.mxu0 0.0
    %1043 = vmatpush1.msra.mxu0 0.0
    %1044 = vmatprep.mubr.f32.mxu0 0.0
    %1045 = vmatmul.mubr.f32.gmra.mrb[0].mxu0 %v978
    %v1046 = vpop.f32.mrb[0].mxu0
    %v1047 = vadd.f32 %v55, %v1046
    %v1048 = vpop.f32.mrb[0].mxu0
    %1049 = vdwg.mxu0
    %1050 = vst [vmem:[%s3] sm:$0x1] %v1047
    %1051 = vst [vmem:[%s4] sm:$0x3] 0.0
    %1052 = vrot.lane.b32.xlu0 %v973, 32
    %v1053 = vpop.permute.xlu0 %1052
    %vm1055 = vcmask 261127
    %1056 = vst.msk [vmem:[%s4 - $0x7] sm:$0x80] %vm1055, %v1053
    %1058 = vrot.lane.b32.xlu0 %v967, 96
    %v1059 = vpop.permute.xlu0 %1058
    %1061 = vst.msk [vmem:[%s4 - $0x6] sm:$0x80] %vm1055, %v1059
    // Predicated region
    $region18: #{my_lstm_forward.1} parent=1 // pred_check
      _
    $region19: #{my_lstm_forward.1} parent=1 // pred_check_branch
      %1063 = sbr.rel (0) target = $region21
    $region20: #{my_lstm_forward.1} parent=1 // pred_region
      _
    $region21: #{my_lstm_forward.1} parent=1 // pred_fallthru
      _
    // Predicated region
    $region22: #{my_lstm_forward.1} parent=1 // pred_check
      _
    $region23: #{my_lstm_forward.1} parent=1 // pred_check_branch
      %1065 = sbr.rel (0) target = $region25
    $region24: #{my_lstm_forward.1} parent=1 // pred_region
      _
    $region25: #{my_lstm_forward.1} parent=1 // pred_fallthru
      _
    // Predicated region
    $region26: #{my_lstm_forward.1} parent=1 // pred_check
      _
    $region27: #{my_lstm_forward.1} parent=1 // pred_check_branch
      %1067 = sbr.rel (0) target = $region29
    $region28: #{my_lstm_forward.1} parent=1 // pred_region
      _
    $region29: #{my_lstm_forward.1} parent=1 // pred_fallthru
      _
    // Predicated region
    $region30: #{my_lstm_forward.1} parent=1 // pred_check
      _
    $region31: #{my_lstm_forward.1} parent=1 // pred_check_branch
      %1069 = sbr.rel (0) target = $region33
    $region32: #{my_lstm_forward.1} parent=1 // pred_region
      _
    $region33: #{my_lstm_forward.1} parent=1 // pred_fallthru
      _
    %1070 = vsyncpa [#allocation3], 1

</llo_original>
